<compile_context>
chip_gen: v5e
topology: v5e:2x2
jax: 0.10.0
libtpu: 0.0.40
codegen_flags: <defaults>
</compile_context>

<pallas_src>
import functools

import jax
import jax.numpy as jnp
from jax.experimental import pallas as pl
from jax.experimental.pallas import tpu as pltpu


# ---------------------------------------------------------------------------
# Kernels
# ---------------------------------------------------------------------------
def _supmo_diag_kernel(feat_ref, part_ref, *, scale, row_tile, batch):
    """Default / `labels` path: identity (diagonal) mask computed in-kernel."""
    i = pl.program_id(0)
    x = feat_ref[...]                                    # native dtype [tb, N]
    tb, n = x.shape

    # logits_max is exact in the native dtype -> no extra f32 copy of the tile.
    row_max = jnp.max(x, axis=1, keepdims=True).astype(jnp.float32)
    logits = x.astype(jnp.float32) - row_max             # [tb, N] f32

    # Diagonal contribution: one full-size lane iota compared against a tiny
    # [tb, 1] broadcast row-id column (single (tb, N) int32 iota, not two).
    col_ids = jax.lax.broadcasted_iota(jnp.int32, (tb, n), 1)
    row_ids = jax.lax.broadcasted_iota(jnp.int32, (tb, 1), 0) + i * row_tile
    pos_sum = jnp.sum(jnp.where(col_ids == row_ids, logits, 0.0),
                      axis=1, keepdims=True)

    # exp_all_logits_sum_log = log(exp(logits).sum(1))
    lse = jnp.log(jnp.sum(jnp.exp(logits), axis=1, keepdims=True))

    # mask.sum(1) == 1 for the identity mask, so no division is needed.
    per_row = -scale * (pos_sum - lse)                   # [tb, 1]
    # Rows past the true batch (zero padding) contribute nothing.
    per_row = jnp.where(row_ids < batch, per_row, 0.0)

    # Lane-dense per-tile partial (unmasked (8,128) store); reduced in JAX.
    part_ref[...] = jnp.full(part_ref.shape, jnp.sum(per_row), jnp.float32)


def _supmo_mask_kernel(feat_ref, mask_ref, part_ref, *, scale, row_tile, batch):
    """User-supplied mask path (mask streamed narrow, upcast to f32 in-kernel)."""
    i = pl.program_id(0)
    x = feat_ref[...]                                    # native dtype [tb, N]
    m = mask_ref[...].astype(jnp.float32)                # [tb, N]
    tb = x.shape[0]

    row_max = jnp.max(x, axis=1, keepdims=True).astype(jnp.float32)
    logits = x.astype(jnp.float32) - row_max
    # NOTE: mirrors the PyTorch code exactly — (logits * mask) is NOT
    # exponentiated despite the 'exp_pos_logits_sum' name, and a *real*
    # all-zero mask row still divides by zero (NaN/Inf), as in the original.
    pos_sum = jnp.sum(logits * m, axis=1, keepdims=True)
    lse = jnp.log(jnp.sum(jnp.exp(logits), axis=1, keepdims=True))
    m_sum = jnp.sum(m, axis=1, keepdims=True)

    row_ids = jax.lax.broadcasted_iota(jnp.int32, (tb, 1), 0) + i * row_tile
    valid = row_ids < batch
    safe_m_sum = jnp.where(valid, m_sum, 1.0)            # guards padding only
    per_row = jnp.where(valid, -scale * (pos_sum - lse) / safe_m_sum, 0.0)

    part_ref[...] = jnp.full(part_ref.shape, jnp.sum(per_row), jnp.float32)


# ---------------------------------------------------------------------------
# Tiling helpers
# ---------------------------------------------------------------------------
def _round_up(x, m):
    return -(-x // m) * m


def _vmem_limit_bytes():
    """Per-generation scoped VMEM limit (half of physical, capped at 64 MiB)."""
    cap = None
    try:
        cap = getattr(pltpu.get_tpu_info(), "vmem_capacity_bytes", None)
    except Exception:  # pragma: no cover - info query unavailable
        cap = None
    if not cap:
        cap = 64 * 1024 * 1024          # conservative: v7x per-TC VMEM
    return int(min(cap // 2, 64 * 1024 * 1024))


def _row_align(*itemsizes):
    """Sublane packing: f32 -> 8 rows, bf16 -> 16, int8/bool -> 32."""
    return max(32 // min(itemsizes), 8)


def _pick_row_tile(batch, n, in_bytes_per_row, *, f32_live, align,
                   vmem_limit, max_row_tile):
    """Row tile (multiple of `align`) sized for both the double-buffered input
    stream and the live f32 intermediates inside the kernel."""
    inter_budget = vmem_limit // 4      # ~f32_live live [tb, N] f32 arrays
    input_budget = vmem_limit // 4      # double-buffered input tiles
    cap = min(max_row_tile,
              max(1, inter_budget // max(f32_live * 4 * n, 1)),
              max(1, input_budget // max(2 * in_bytes_per_row, 1)))
    # Force >= 2 grid steps (>= 8 when the batch allows): enables DMA/compute
    # overlap everywhere and megacore sharding of the parallel axis on v7x.
    if batch > align:
        target_steps = 8 if batch >= 8 * align else 2
        cap = min(cap, -(-batch // target_steps))
    cap = max(align, (cap // align) * align)
    return min(cap, _round_up(batch, align))


# ---------------------------------------------------------------------------
# Wrapper
# ---------------------------------------------------------------------------
def supmo_loss(features, labels=None, mask=None, *, temperature=1.0,
               base_temperature=1.0, max_row_tile=1024):
    """JAX/Pallas port of SupMoLoss.forward (forward pass only)."""
    if labels is not None and mask is not None:
        raise ValueError('Cannot define both `labels` and `mask`')

    B, N = features.shape
    scale = float(temperature) / float(base_temperature)
    vmem_limit = _vmem_limit_bytes()

    if mask is None:
        # Default (SimCLR-degenerate) and `labels` paths: the PyTorch code
        # builds an identity-pattern mask (label values are unused — this is
        # an intentional reproduction of the original's behavior).
        if labels is not None and labels.shape[0] != B:
            raise ValueError('Num of labels does not match num of features')

        align = _row_align(features.dtype.itemsize)
        tb = _pick_row_tile(B, N, N * features.dtype.itemsize,
                            f32_live=4, align=align,
                            vmem_limit=vmem_limit, max_row_tile=max_row_tile)
        padded_b = _round_up(B, tb)
        feats = features if padded_b == B else jnp.pad(
            features, ((0, padded_b - B), (0, 0)))
        grid = (padded_b // tb,)
        kernel = functools.partial(_supmo_diag_kernel, scale=scale,
                                   row_tile=tb, batch=B)
        parts = pl.pallas_call(
            kernel,
            out_shape=jax.ShapeDtypeStruct((8 * grid[0], 128), jnp.float32),
            grid_spec=pltpu.PrefetchScalarGridSpec(
                num_scalar_prefetch=0,
                grid=grid,
                in_specs=[pl.BlockSpec((tb, N), lambda i: (i, 0))],
                out_specs=pl.BlockSpec((8, 128), lambda i: (i, 0)),
            ),
            compiler_params=pltpu.CompilerParams(
                dimension_semantics=("parallel",),
                vmem_limit_bytes=vmem_limit),
        )(feats)
    else:
        if mask.shape != (B, N):
            raise ValueError('mask must have the same shape as features')
        # Keep the mask HBM stream narrow: bools go to bf16 (2 B/elem) rather
        # than f32; the upcast to f32 happens in-kernel.
        if mask.dtype == jnp.bool_:
            mask = mask.astype(jnp.bfloat16)

        align = _row_align(features.dtype.itemsize, mask.dtype.itemsize)
        in_bytes_per_row = N * (features.dtype.itemsize + mask.dtype.itemsize)
        tb = _pick_row_tile(B, N, in_bytes_per_row,
                            f32_live=5, align=align,
                            vmem_limit=vmem_limit, max_row_tile=max_row_tile)
        padded_b = _round_up(B, tb)
        if padded_b != B:
            features = jnp.pad(features, ((0, padded_b - B), (0, 0)))
            mask = jnp.pad(mask, ((0, padded_b - B), (0, 0)))
        grid = (padded_b // tb,)
        kernel = functools.partial(_supmo_mask_kernel, scale=scale,
                                   row_tile=tb, batch=B)
        parts = pl.pallas_call(
            kernel,
            out_shape=jax.ShapeDtypeStruct((8 * grid[0], 128), jnp.float32),
            grid_spec=pltpu.PrefetchScalarGridSpec(
                num_scalar_prefetch=0,
                grid=grid,
                in_specs=[pl.BlockSpec((tb, N), lambda i: (i, 0)),
                          pl.BlockSpec((tb, N), lambda i: (i, 0))],
                out_specs=pl.BlockSpec((8, 128), lambda i: (i, 0)),
            ),
            compiler_params=pltpu.CompilerParams(
                dimension_semantics=("parallel",),
                vmem_limit_bytes=vmem_limit),
        )(features, mask)

    # Each (8,128) output block is uniformly filled with its tile's partial
    # sum; read one representative element per block (exact, tiny gather).
    # NOTE: this depends on the (8,128) out_specs block above — keep in sync.
    return jnp.sum(parts[::8, 0]) / B


# ---------------------------------------------------------------------------
# Pure-JAX reference mirroring the PyTorch code exactly
# ---------------------------------------------------------------------------
def _supmo_loss_ref(features, mask, temperature=1.0, base_temperature=1.0):
    f = features.astype(jnp.float32)
    m = mask.astype(jnp.float32)
    row_max = jnp.max(f, axis=1, keepdims=True)
    logits = f - row_max
    pos_sum = jnp.sum(logits * m, axis=1)
    lse = jnp.log(jnp.sum(jnp.exp(logits), axis=1))
    log_prob = pos_sum - lse
    mean_log_prob_pos = log_prob / jnp.sum(m, axis=1)
    loss = -(temperature / base_temperature) * mean_log_prob_pos
    return jnp.mean(loss)


if __name__ == "__main__":
    key = jax.random.PRNGKey(0)
    k0, k1, k2, k3 = jax.random.split(key, 4)

    # --- default path (labels=None, mask=None) -> identity mask -------------
    B, N = 16, 16   # features is the [bsz, bsz] similarity/logits matrix
    features = jax.random.normal(k0, (B, N), dtype=jnp.float32)
    loss = jax.block_until_ready(supmo_loss(features))
    ref = _supmo_loss_ref(features, jnp.eye(B, N, dtype=jnp.float32))
    assert jnp.allclose(loss, ref, atol=1e-5, rtol=1e-5), (loss, ref)

    # --- labels path (identity-pattern mask, label values unused) -----------
    loss_l = jax.block_until_ready(supmo_loss(features, labels=jnp.arange(B)))
    assert jnp.allclose(loss_l, ref, atol=1e-5, rtol=1e-5), (loss_l, ref)

    # --- bf16 features, batch not a multiple of the tile (exercises padding) -
    B2, N2 = 40, 64
    feats2 = jax.random.normal(k1, (B2, N2), jnp.float32).astype(jnp.bfloat16)
    loss2 = jax.block_until_ready(supmo_loss(feats2))
    ref2 = _supmo_loss_ref(feats2.astype(jnp.float32),
                           jnp.eye(B2, N2, dtype=jnp.float32))
    assert jnp.allclose(loss2, ref2, atol=1e-4, rtol=1e-4), (loss2, ref2)

    # --- user-supplied float mask --------------------------------------------
    rand_mask = (jax.random.uniform(k2, (B, N)) > 0.5).astype(jnp.float32)
    rand_mask = jnp.maximum(rand_mask, jnp.eye(B, N, dtype=jnp.float32))
    loss_m = jax.block_until_ready(supmo_loss(features, mask=rand_mask))
    ref_m = _supmo_loss_ref(features, rand_mask)
    assert jnp.allclose(loss_m, ref_m, atol=1e-5, rtol=1e-5), (loss_m, ref_m)

    # --- user-supplied bool mask (streamed as bf16, upcast in-kernel) --------
    bool_mask = jnp.logical_or(jax.random.uniform(k3, (B, N)) > 0.5,
                               jnp.eye(B, N, dtype=bool))
    loss_b = jax.block_until_ready(supmo_loss(features, mask=bool_mask))
    ref_b = _supmo_loss_ref(features, bool_mask.astype(jnp.float32))
    assert jnp.allclose(loss_b, ref_b, atol=1e-5, rtol=1e-5), (loss_b, ref_b)

    print("KERNEL_OK")
</pallas_src>

<mosaic_0001>
module attributes {stable_mosaic.version = 11 : i64} {
  func.func @_supmo_diag_kernel(%arg0: i32, %arg1: memref<8x16xf32, #tpu.memory_space<vmem>>, %arg2: memref<8x128xf32, #tpu.memory_space<vmem>>) attributes {dimension_semantics = [#tpu.dimension_semantics<parallel>], iteration_bounds = array<i64: 2>, scalar_prefetch = 0 : i64, scratch_operands = 0 : i64, tpu.core_type = #tpu.core_type<tc>, window_params = [{transform_indices = @transform_0, window_bounds = array<i64: 8, 16>}, {transform_indices = @transform_1, window_bounds = array<i64: 8, 128>}]} {
    %c0 = arith.constant 0 : index
    %c0_0 = arith.constant 0 : index
    %0 = vector.load %arg1[%c0, %c0_0] : memref<8x16xf32, #tpu.memory_space<vmem>>, vector<8x16xf32>
    %cst = arith.constant dense<0xFF800000> : vector<8xf32>
    %1 = vector.multi_reduction <maximumf>, %0, %cst [1] : vector<8x16xf32> to vector<8xf32>
    %2 = vector.shape_cast %1 : vector<8xf32> to vector<8x1xf32>
    %3 = vector.broadcast %2 : vector<8x1xf32> to vector<8x16xf32>
    %4 = arith.subf %0, %3 : vector<8x16xf32>
    %5 = tpu.iota {dimensions = array<i32: 1>} : vector<8x16xi32>
    %6 = tpu.iota {dimensions = array<i32: 0>} : vector<8x1xi32>
    %c8_i32 = arith.constant 8 : i32
    %7 = arith.muli %arg0, %c8_i32 : i32
    %8 = vector.broadcast %7 : i32 to vector<8x1xi32>
    %9 = arith.addi %6, %8 : vector<8x1xi32>
    %10 = vector.broadcast %9 : vector<8x1xi32> to vector<8x16xi32>
    %11 = arith.cmpi eq, %5, %10 : vector<8x16xi32>
    %cst_1 = arith.constant 0.000000e+00 : f32
    %12 = vector.broadcast %cst_1 : f32 to vector<8x16xf32>
    %13 = arith.select %11, %4, %12 : vector<8x16xi1>, vector<8x16xf32>
    %cst_2 = arith.constant dense<0.000000e+00> : vector<8xf32>
    %14 = vector.multi_reduction <add>, %13, %cst_2 [1] : vector<8x16xf32> to vector<8xf32>
    %15 = vector.shape_cast %14 : vector<8xf32> to vector<8x1xf32>
    %16 = math.exp %4 : vector<8x16xf32>
    %cst_3 = arith.constant dense<0.000000e+00> : vector<8xf32>
    %17 = vector.multi_reduction <add>, %16, %cst_3 [1] : vector<8x16xf32> to vector<8xf32>
    %18 = vector.shape_cast %17 : vector<8xf32> to vector<8x1xf32>
    %19 = math.log %18 : vector<8x1xf32>
    %20 = arith.subf %15, %19 : vector<8x1xf32>
    %cst_4 = arith.constant -1.000000e+00 : f32
    %21 = vector.broadcast %cst_4 : f32 to vector<8x1xf32>
    %22 = arith.mulf %21, %20 : vector<8x1xf32>
    %c16_i32 = arith.constant 16 : i32
    %23 = vector.broadcast %c16_i32 : i32 to vector<8x1xi32>
    %24 = arith.cmpi slt, %9, %23 : vector<8x1xi32>
    %cst_5 = arith.constant 0.000000e+00 : f32
    %25 = vector.broadcast %cst_5 : f32 to vector<8x1xf32>
    %26 = arith.select %24, %22, %25 : vector<8x1xi1>, vector<8x1xf32>
    %27 = vector.shape_cast %26 : vector<8x1xf32> to vector<1x8x1xf32>
    %cst_6 = arith.constant dense<0.000000e+00> : vector<1xf32>
    %28 = vector.multi_reduction <add>, %27, %cst_6 [1, 2] : vector<1x8x1xf32> to vector<1xf32>
    %29 = vector.shape_cast %28 : vector<1xf32> to vector<1x1x1xf32>
    %30 = vector.extract %29[0, 0, 0] : f32 from vector<1x1x1xf32>
    %31 = vector.broadcast %30 : f32 to vector<8x128xf32>
    %c0_7 = arith.constant 0 : index
    %c0_8 = arith.constant 0 : index
    %32 = vector.load %arg2[%c0_7, %c0_8] : memref<8x128xf32, #tpu.memory_space<vmem>>, vector<8x128xf32>
    tpu.vector_store %arg2[%c0_7, %c0_8], %31 {strides = array<i32>} : memref<8x128xf32, #tpu.memory_space<vmem>>, vector<8x128xf32>,
    return
  }
  func.func @transform_0(%arg0: i32) -> (i32, i32) {
    %c0_i32 = arith.constant 0 : i32
    %c0_i32_0 = arith.constant 0 : i32
    return %arg0, %c0_i32 : i32, i32
  }
  func.func @transform_1(%arg0: i32) -> (i32, i32) {
    %c0_i32 = arith.constant 0 : i32
    %c0_i32_0 = arith.constant 0 : i32
    return %arg0, %c0_i32 : i32, i32
  }
}

</mosaic_0001>

<llo_original>
// kernel: tpu_custom_call.1
$region0: #{tpu_custom_call.1}
  #allocation0 [shape = 'u32[]', space=smem, size = 0x4, offset = 0x4, fixed_abs, tag = 'smem constant byte address 0x4 - core index']
  #allocation1 [shape = 'u32[72,128]{1,0:T(1,128)}', space=vmem, size = 0x9000, scoped, tag = 'internal scratch']
  %s0 = inlined_call_operand.hbm [shape: f32[16,16], index: 0, kind: input, shape index: {}]
  %s1 = inlined_call_operand.hbm [shape: f32[16,128], index: 1, kind: output, shape index: {}]
  %s2 = sld [smem:[#allocation0]]
  $region41: #{tpu_custom_call.1} parent=0
    _
  %s4 = ssub.s32 1, %s2
  %s5 = scalar_select 0, %s4, %s2
  $region1: #{tpu_custom_call.1} parent=0
    #allocation2 [shape = 'u8[8192]{0}', space=vmem, size = 0x2000, scoped, tag = 'input window, operand 0']
    #allocation3 [shape = 's32[2]{0}', space=sflag, size = 0x8, scoped, tag = 'scoped memory for tpu_custom_call.1']
    #allocation4 [shape = 's32[2]{0}', space=sflag, size = 0x8, scoped, tag = 'scoped memory for tpu_custom_call.1']
    #allocation5 [shape = 'u8[8192]{0}', space=vmem, size = 0x2000, scoped, tag = 'output window, operand 0']
    %6 = vsyncpa [#allocation3], 0
    %s7 = scalar_lea.sflag [#allocation3], 1
    %8 = vsyncpa %s7, 0
    %9 = vsyncpa [#allocation4], 0
    %s10 = scalar_lea.sflag [#allocation4], 1
    %11 = vsyncpa %s10, 0
    loop: start=0, step=1, limit=4
    $region2: #{tpu_custom_call.1} parent=1 // loop_pre_header
      _
    $region3: #{tpu_custom_call.1} parent=1 // loop_header
      %s13 = sphi 0, %s17
      %p14 = scmp.ge.s32.totalorder %s13, 4
      %s23 = sphi 0, %s25
      %s26 = sphi 0, %s23
      %s27 = sphi 0, %s26
      %s43 = sphi 0, %s27
      %s49 = sphi 0, %s51
      %s52 = sphi 0, %s49
      %s53 = sphi 0, %s52
      %s69 = sphi 0, %s53
    $region4: #{tpu_custom_call.1} parent=1 // loop_header_branch
      %16 = sbr.rel (%p14) target = $region8
    $region5: #{tpu_custom_call.1} parent=1 // loop_body
      %s18 = ssub.s32 %s13, 1
      %s19 = ssub.s32 %s13, 2
      %s20 = sadd.s32 %s13, 1
      %s21 = ssub.s32 %s13, %s20
      %p22 = scmp.eq.s32.totalorder %s21, 0
      %s24 = sadd.s32 %s23, 1
      %s25 = scalar_select %p22, %s23, %s24
      %p28 = pneg %p22
      %p29 = scmp.eq.s32.totalorder %s13, 1
      %p30 = por %p28, %p29
      %p31 = scmp.ne.s32.totalorder %s23, %s26
      %p32 = scmp.eq.s32.totalorder %s13, 0
      %p33 = por %p31, %p32
      %p34 = scmp.ne.s32.totalorder %s23, %s26
      %p35 = scmp.eq.s32.totalorder %s18, 1
      %p36 = por %p34, %p35
      %p37 = scmp.ne.s32.totalorder %s26, %s27
      %p38 = scmp.eq.s32.totalorder %s18, 0
      %p39 = por %p37, %p38
      %p40 = scmp.ne.s32.totalorder %s26, %s27
      %p41 = scmp.eq.s32.totalorder %s19, 1
      %p42 = por %p40, %p41
      %p44 = scmp.ne.s32.totalorder %s27, %s43
      %p45 = scmp.eq.s32.totalorder %s19, 0
      %p46 = por %p44, %p45
      %s47 = ssub.s32 %s13, %s20
      %p48 = scmp.eq.s32.totalorder %s47, 0
      %s50 = sadd.s32 %s49, 1
      %s51 = scalar_select %p48, %s49, %s50
      %p54 = pneg %p48
      %p55 = scmp.eq.s32.totalorder %s13, 1
      %p56 = por %p54, %p55
      %p57 = scmp.ne.s32.totalorder %s49, %s52
      %p58 = scmp.eq.s32.totalorder %s13, 0
      %p59 = por %p57, %p58
      %p60 = scmp.ne.s32.totalorder %s49, %s52
      %p61 = scmp.eq.s32.totalorder %s18, 1
      %p62 = por %p60, %p61
      %p63 = scmp.ne.s32.totalorder %s52, %s53
      %p64 = scmp.eq.s32.totalorder %s18, 0
      %p65 = por %p63, %p64
      %p66 = scmp.ne.s32.totalorder %s52, %s53
      %p67 = scmp.eq.s32.totalorder %s19, 1
      %p68 = por %p66, %p67
      %p70 = scmp.ne.s32.totalorder %s53, %s69
      %p71 = scmp.eq.s32.totalorder %s19, 0
      %p72 = por %p70, %p71
      %p73 = scmp.le.s32.totalorder 1, %s13
      %p74 = scmp.lt.s32.totalorder %s13, 3
      %p75 = pnand %p73, %p74
      %p76 = pneg %p75
      // Predicated region
      $region9: #{tpu_custom_call.1} parent=5 // pred_check
        _
      $region10: #{tpu_custom_call.1} parent=5 // pred_check_branch
        %78 = sbr.rel (%p75) target = $region12
      $region11: #{tpu_custom_call.1} parent=5 // pred_region
        %s79 = ssub.s32 %s13, 1
      $region12: #{tpu_custom_call.1} parent=5 // pred_fallthru
        _
      %p80 = scmp.lt.s32.totalorder %s13, 2
      // Predicated region
      $region13: #{tpu_custom_call.1} parent=5 // pred_check
        %p81 = pneg %p80
      $region14: #{tpu_custom_call.1} parent=5 // pred_check_branch
        %83 = sbr.rel (%p81) target = $region16
      $region15: #{tpu_custom_call.1} parent=5 // pred_region
        // Predicated region
        $region17: #{tpu_custom_call.1} parent=15 // pred_check
          %p84 = pneg %p33
        $region18: #{tpu_custom_call.1} parent=15 // pred_check_branch
          %86 = sbr.rel (%p84) target = $region20
        $region19: #{tpu_custom_call.1} parent=15 // pred_region
          %s87 = sand.u32 %s23, 1
          %s88 = scalar_lea.sflag [#allocation3], %s87
          %s89 = sand.u32 %s23, 1
          %s90 = smul.addr %s89, 8
          %s91 = scalar_lea.vmem [#allocation2], %s90
          %93 = vsyncadd %s88, 0
          %s94 = smul.addr %s13, 8
          %s95 = scalar_lea.hbm %s0, %s94
          %s97 = sshll.u32 %s95, 4
          %s98 = int_to_ptr.hbm [resolvable:$true] %s97
          %s99 = sshll.u32 %s91, 4
          %s100 = int_to_ptr.vmem [resolvable:$true] %s99
          %102 = dma.hbm_to_vmem [thread:$0]  %s98, 128, %s100, %s88
        $region20: #{tpu_custom_call.1} parent=15 // pred_fallthru
          _
      $region16: #{tpu_custom_call.1} parent=5 // pred_fallthru
        _
      %p103 = scmp.le.s32.totalorder 1, %s13
      %p104 = scmp.lt.s32.totalorder %s13, 3
      %p105 = pnand %p103, %p104
      %p106 = pneg %p105
      // Predicated region
      $region21: #{tpu_custom_call.1} parent=5 // pred_check
        _
      $region22: #{tpu_custom_call.1} parent=5 // pred_check_branch
        %108 = sbr.rel (%p105) target = $region24
      $region23: #{tpu_custom_call.1} parent=5 // pred_region
        %s109 = ssub.s32 %s13, 1
        %s110 = sand.u32 %s26, 1
        %s111 = scalar_lea.sflag [#allocation3], %s110
        %s112 = sand.u32 %s26, 1
        %s113 = smul.addr %s112, 8
        %s114 = scalar_lea.vmem [#allocation2], %s113
        // Predicated region
        $region25: #{tpu_custom_call.1} parent=23 // pred_check
          %p115 = pneg %p39
        $region26: #{tpu_custom_call.1} parent=23 // pred_check_branch
          %117 = sbr.rel (%p115) target = $region28
        $region27: #{tpu_custom_call.1} parent=23 // pred_region
          %119 = dma.done %s111, 128
        $region28: #{tpu_custom_call.1} parent=23 // pred_fallthru
          _
        %s120 = sand.u32 %s26, 1
        %s121 = scalar_lea.sflag [#allocation3], %s120
        %s122 = sand.u32 %s26, 1
        %s123 = smul.addr %s122, 8
        %s124 = scalar_lea.vmem [#allocation2], %s123
        %p125 = pneg %p39
        %p126 = pneg %p36
        %p127 = pneg %p65
        %p128 = pneg %p62
        %s129 = sand.u32 %s52, 1
        %s130 = scalar_lea.sflag [#allocation4], %s129
        %s131 = sand.u32 %s52, 1
        %s132 = smul.addr %s131, 8
        %s133 = scalar_lea.vmem [#allocation5], %s132
        %v134 = vld [vmem:[%s114] sm:$0xff]
        %vm135 = vcmask 130048
        %v136 = vsel %vm135, %v134, -inf
        %137 = vmax.xlane.f32.xlu0 %v136
        %v138 = vpop.xlane.xlu0 %137
        %v139 = vsub.f32 %v134, %v138
        %v140 = vlaneseq
        %v141 = vand.u32 %v140, 127
        %v142 = vlaneseq
        %v143 = vshrl.u32 %v142, 7
        %s144 = smul.u32 %s18, 8
        %v145 = vstv %s144
        %v146 = vadd.s32 %v143, %v145
        %vm147 = vcmp.eq.s32.totalorder %v141, %v146
        %v148 = vsel %vm147, %v139, 0.0
        %v149 = vsel %vm135, %v148, 0.0
        %150 = vadd.xlane.f32.xlu0 %v149
        %v151 = vpop.xlane.xlu0 %150
        %v152 = vmul.f32 %v139, 1.442695
        %v153 = vpow.pop %v152
        %v154 = vsel %vm135, %v153, 0.0
        %155 = vadd.xlane.f32.xlu0 %v154
        %v156 = vpop.xlane.xlu0 %155
        %v157 = vlog2.pop %v156
        %v158 = vmul.f32 %v157, 0.6931472
        %v159 = vsub.f32 %v151, %v158
        %v160 = vmul.f32 %v159, -1.0
        %vm161 = vcmp.lt.s32.totalorder %v146, 16
        %v162 = vsel %vm161, %v160, 0.0
        %vm163 = vcmask 7168
        %v164 = vsel %vm163, %v162, 0.0
        %165 = vadd.xlane.f32.xlu0 %v164
        %v166 = vpop.xlane.xlu0 %165
        %v167 = vrot.slane %v166, 4
        %v168 = vadd.f32 %v166, %v167
        %v169 = vrot.slane %v168, 2
        %v170 = vadd.f32 %v168, %v169
        %v171 = vrot.slane %v170, 1
        %v172 = vadd.f32 %v170, %v171
        %s173 = vtos %v172
        %v174 = vstv %s173
        %175 = vst [vmem:[%s133] sm:$0xff] %v174
        %s176 = sand.u32 %s52, 1
        %s177 = scalar_lea.sflag [#allocation4], %s176
        %s178 = sand.u32 %s52, 1
        %s179 = smul.addr %s178, 8
        %s180 = scalar_lea.vmem [#allocation5], %s179
        // Predicated region
        $region29: #{tpu_custom_call.1} parent=23 // pred_check
          %p181 = pneg %p62
        $region30: #{tpu_custom_call.1} parent=23 // pred_check_branch
          %183 = sbr.rel (%p181) target = $region32
        $region31: #{tpu_custom_call.1} parent=23 // pred_region
          %185 = vsyncadd %s177, 0
          %s186 = smul.addr %s18, 8
          %s187 = scalar_lea.hbm %s1, %s186
          %s189 = sshll.u32 %s180, 4
          %s190 = int_to_ptr.vmem [resolvable:$true] %s189
          %s191 = sshll.u32 %s187, 4
          %s192 = int_to_ptr.hbm [resolvable:$true] %s191
          %194 = dma.vmem_to_hbm [thread:$0]  %s190, 128, %s192, %s177
        $region32: #{tpu_custom_call.1} parent=23 // pred_fallthru
          _
      $region24: #{tpu_custom_call.1} parent=5 // pred_fallthru
        _
      %p195 = scmp.le.s32.totalorder 2, %s13
      // Predicated region
      $region33: #{tpu_custom_call.1} parent=5 // pred_check
        %p196 = pneg %p195
      $region34: #{tpu_custom_call.1} parent=5 // pred_check_branch
        %198 = sbr.rel (%p196) target = $region36
      $region35: #{tpu_custom_call.1} parent=5 // pred_region
        %s199 = ssub.s32 %s13, 2
        // Predicated region
        $region37: #{tpu_custom_call.1} parent=35 // pred_check
          %p200 = pneg %p68
        $region38: #{tpu_custom_call.1} parent=35 // pred_check_branch
          %202 = sbr.rel (%p200) target = $region40
        $region39: #{tpu_custom_call.1} parent=35 // pred_region
          %s203 = sand.u32 %s53, 1
          %s204 = scalar_lea.sflag [#allocation4], %s203
          %s205 = sand.u32 %s53, 1
          %s206 = smul.addr %s205, 8
          %s207 = scalar_lea.vmem [#allocation5], %s206
          %209 = dma.done %s204, 128
        $region40: #{tpu_custom_call.1} parent=35 // pred_fallthru
          _
      $region36: #{tpu_custom_call.1} parent=5 // pred_fallthru
        _
    $region6: #{tpu_custom_call.1} parent=1 // loop_footer
      %s17 = sadd.s32 1, %s13
    $region7: #{tpu_custom_call.1} parent=1 // loop_footer_branch
      %12 = sbr.rel target = $region3
    $region8: #{tpu_custom_call.1} parent=1 // loop_exit
      _
    %210 = vsyncpa [#allocation3], 1
    %s211 = scalar_lea.sflag [#allocation3], 1
    %212 = vsyncpa %s211, 1
    %213 = vsyncpa [#allocation4], 1
    %s214 = scalar_lea.sflag [#allocation4], 1
    %215 = vsyncpa %s214, 1

</llo_original>
